<compile_context>
chip_gen: v6e
topology: v6e:2x2x1
jax: 0.10.0
libtpu: 0.0.40
codegen_flags: <defaults>
</compile_context>

<pallas_src>
import math
import functools

import jax
import jax.numpy as jnp
from jax import lax
from jax.experimental import pallas as pl
from jax.experimental.pallas import tpu as pltpu


def _round_up(x, m):
    return ((x + m - 1) // m) * m


def _infonce_kernel(temp_ref, x1_ref, x2_ref, out_ref,
                    x2n_scr, mcol_scr, lcol_scr,
                    *, valid_b, padded):
    """Grid step (m = modality, i = anchor-row block).

    temp_ref : SMEM (1,) f32          temperature
    x1_ref   : VMEM (tq, Dp)          anchor row block
    x2_ref   : VMEM (1, Bp, Dp)       full slab of modality m (resident across i)
    out_ref  : VMEM (1, 1, 1) f32     per-modality loss accumulator
    x2n_scr  : VMEM (Bp, Dp)          cached L2-normalized modality slab (matmul dtype)
    mcol_scr : VMEM (1, Bp) f32       running column max
    lcol_scr : VMEM (1, Bp) f32       running column sum-of-exp
    """
    i = pl.program_id(1)
    nb = pl.num_programs(1)
    tq = x1_ref.shape[0]

    inv_t = 1.0 / temp_ref[0]
    neg_big = jnp.float32(-1e30)

    # ---- per-modality init on the first row block: normalize x2 once, reset accumulators ----
    @pl.when(i == 0)
    def _init():
        x2 = x2_ref[0].astype(jnp.float32)                                   # (Bp, Dp)
        ssq2 = jnp.sum(x2 * x2, axis=-1, keepdims=True)
        r2 = lax.rsqrt(jnp.maximum(ssq2, 1e-24))       # == 1 / max(||x||, 1e-12)  (EUP)
        x2n_scr[...] = (x2 * r2).astype(x2n_scr.dtype)
        mcol_scr[...] = jnp.full_like(mcol_scr, neg_big)
        lcol_scr[...] = jnp.zeros_like(lcol_scr)
        out_ref[...] = jnp.zeros_like(out_ref)

    # ---- normalize this anchor row block, folding 1/temperature into the per-row scale ----
    x1 = x1_ref[...].astype(jnp.float32)                                     # (tq, Dp)
    ssq1 = jnp.sum(x1 * x1, axis=-1, keepdims=True)
    r1 = lax.rsqrt(jnp.maximum(ssq1, 1e-24)) * inv_t                         # (tq, 1)
    x1n = (x1 * r1).astype(x2n_scr.dtype)

    # ---- (tq, Bp) similarity tile on the MXU (f32 accumulate) ----
    sim = lax.dot_general(
        x1n, x2n_scr[...],
        dimension_numbers=(((1,), (1,)), ((), ())),
        preferred_element_type=jnp.float32,
    )                                                                        # (tq, Bp) f32

    bp = sim.shape[1]
    row_g = i * tq + lax.broadcasted_iota(jnp.int32, (tq, bp), 0)            # global row ids
    col_g = lax.broadcasted_iota(jnp.int32, (tq, bp), 1)                     # global col ids

    if padded:
        valid = (row_g < valid_b) & (col_g < valid_b)
        sim = jnp.where(valid, sim, neg_big)

    # ---- row-direction CE (full rows live in this tile -> lane reductions only) ----
    m_row = jnp.max(sim, axis=-1, keepdims=True)                             # (tq, 1)
    p_row = jnp.exp(sim - m_row)
    lse_row = m_row + jnp.log(jnp.sum(p_row, axis=-1, keepdims=True))        # (tq, 1)

    # diagonal, computed once and reused for both CE directions
    diag = jnp.sum(jnp.where(col_g == row_g, sim, 0.0), axis=-1, keepdims=True)

    row_term = lse_row - 2.0 * diag                                          # (tq, 1)
    if padded:
        row_term = jnp.where(row_g[:, :1] < valid_b, row_term, 0.0)
    out_ref[...] = out_ref[...] + jnp.sum(row_term)

    # ---- column-direction online logsumexp accumulation across row blocks ----
    blk_mcol = jnp.max(sim, axis=0, keepdims=True)                           # (1, Bp)
    m_old = mcol_scr[...]
    m_new = jnp.maximum(m_old, blk_mcol)
    p_col = jnp.exp(sim - m_new)
    lcol_scr[...] = lcol_scr[...] * jnp.exp(m_old - m_new) \
        + jnp.sum(p_col, axis=0, keepdims=True)
    mcol_scr[...] = m_new

    # ---- finalize after the last row block of this modality ----
    @pl.when(i == nb - 1)
    def _fin():
        lse_col = mcol_scr[...] + jnp.log(lcol_scr[...])                     # (1, Bp)
        if padded:
            col_ok = lax.broadcasted_iota(jnp.int32, (1, bp), 1) < valid_b
            lse_col = jnp.where(col_ok, lse_col, 0.0)
        total = out_ref[...] + jnp.sum(lse_col)
        out_ref[...] = total * jnp.float32(0.5 / valid_b)


@functools.partial(jax.jit, static_argnames=("block_rows",))
def infonce_anchor_pairs_loss(x1, x2_stack, temperature, block_rows=256):
    """Total symmetric InfoNCE loss of the anchor (B, D) against each slab of (M, B, D)."""
    B, D = x1.shape
    M = x2_stack.shape[0]
    assert x2_stack.shape[1:] == (B, D)

    Dp = _round_up(D, 128)                              # lane-dense feature dim
    tq = _round_up(min(int(block_rows), _round_up(B, 8)), 8)
    Bp = _round_up(B, tq)
    nb = Bp // tq
    padded = Bp != B

    if Dp != D:
        x1 = jnp.pad(x1, ((0, 0), (0, Dp - D)))
        x2_stack = jnp.pad(x2_stack, ((0, 0), (0, 0), (0, Dp - D)))
    if padded:
        x1 = jnp.pad(x1, ((0, Bp - B), (0, 0)))
        x2_stack = jnp.pad(x2_stack, ((0, 0), (0, Bp - B), (0, 0)))

    # bf16 inputs -> bf16 MXU operands (f32 accumulate); otherwise stay f32.
    mm_dtype = jnp.bfloat16 if x1.dtype == jnp.bfloat16 else jnp.float32
    in_bytes = jnp.dtype(x1.dtype).itemsize
    mm_bytes = jnp.dtype(mm_dtype).itemsize

    temp = jnp.reshape(temperature.astype(jnp.float32), (1,))

    kernel = functools.partial(_infonce_kernel, valid_b=B, padded=padded)

    # VMEM budget: double-buffered inputs + normalized-x2 cache + tile working set.
    vmem_need = (2 * tq * Dp * in_bytes             # anchor row block (double buffered)
                 + 2 * Bp * Dp * in_bytes           # modality slab (double buffered)
                 + Bp * Dp * mm_bytes               # cached normalized slab
                 + 4 * tq * Bp * 4                  # sim / exp working set
                 + 8 * Bp * 4 + (1 << 20))
    vmem_limit = int(min(max(vmem_need, 32 * 1024 * 1024), 64 * 1024 * 1024))  # v7x cap

    cost = pl.CostEstimate(
        flops=2 * M * Bp * Bp * Dp + 4 * (M + 1) * Bp * Dp,
        transcendentals=2 * M * Bp * Bp + 3 * M * Bp + (M + 1) * Bp,
        bytes_accessed=2 * M * Bp * Dp * in_bytes + M * 4,
    )

    out = pl.pallas_call(
        kernel,
        out_shape=jax.ShapeDtypeStruct((M, 1, 1), jnp.float32),
        grid=(M, nb),
        in_specs=[
            pl.BlockSpec(memory_space=pltpu.SMEM),                    # temperature scalar
            pl.BlockSpec((tq, Dp), lambda m, i: (i, 0)),              # anchor row block
            pl.BlockSpec((1, Bp, Dp), lambda m, i: (m, 0, 0)),        # modality slab (resident over i)
        ],
        out_specs=pl.BlockSpec((1, 1, 1), lambda m, i: (m, 0, 0)),
        scratch_shapes=[
            pltpu.VMEM((Bp, Dp), mm_dtype),     # normalized modality slab (cached per modality)
            pltpu.VMEM((1, Bp), jnp.float32),   # running column max
            pltpu.VMEM((1, Bp), jnp.float32),   # running column sum-of-exp
        ],
        compiler_params=pltpu.CompilerParams(
            dimension_semantics=("parallel", "arbitrary"),
            vmem_limit_bytes=vmem_limit,
        ),
        cost_estimate=cost,
    )(temp, x1, x2_stack)

    return jnp.sum(out)


class InfoNCEAnchorPallas:
    """JAX/Pallas port of InfoNCEAnchor.forward (gamma=0 path)."""

    def __init__(self, temperature=0.07, modalities=("video", "audio", "text"),
                 anchor="video", gamma=0.0, cos=False,
                 temperature_max=0.1, temperature_min=0.01, period=10,
                 block_rows=256):
        self.temperature = float(temperature)
        self.modalities = list(modalities)
        self.anchor = anchor
        self.gamma = gamma
        self.cos = cos
        self.temperature_max = temperature_max
        self.temperature_min = temperature_min
        self.period = period
        self.block_rows = int(block_rows)
        # TODO(synk): gamma != 0 (additive Gaussian noise via torch.normal) would need
        # pltpu.prng_seed/stateful_normal inside the kernel; this config uses gamma = 0.0.

    def _current_temperature(self, current_epoch):
        if self.cos:
            return ((self.temperature_max - self.temperature_min)
                    * (1.0 + math.cos(2.0 * math.pi * current_epoch / self.period)) / 2.0
                    + self.temperature_min)
        return self.temperature

    def __call__(self, outputs, current_epoch=0):
        temp = jnp.asarray(self._current_temperature(current_epoch), jnp.float32)
        others = [outputs[m] for m in self.modalities if m != self.anchor]
        if not others:
            return jnp.asarray(0.0, jnp.float32)
        x2_stack = jnp.stack(others, axis=0)
        return infonce_anchor_pairs_loss(outputs[self.anchor], x2_stack, temp,
                                         block_rows=self.block_rows)


def _reference_loss(outputs, anchor, modalities, temperature):
    """Pure-JAX reference matching the PyTorch semantics (gamma=0, cos=False)."""
    def pair(x1, x2):
        x1 = x1 / jnp.maximum(jnp.linalg.norm(x1, axis=-1, keepdims=True), 1e-12)
        x2 = x2 / jnp.maximum(jnp.linalg.norm(x2, axis=-1, keepdims=True), 1e-12)
        sim = (x1 @ x2.T) / temperature
        labels = jnp.arange(sim.shape[0])
        l1 = -jnp.mean(jax.nn.log_softmax(sim, axis=-1)[labels, labels])
        l2 = -jnp.mean(jax.nn.log_softmax(sim.T, axis=-1)[labels, labels])
        return (l1 + l2) / 2.0
    total = jnp.asarray(0.0, jnp.float32)
    for m in modalities:
        if m != anchor:
            total = total + pair(outputs[anchor], outputs[m])
    return total


if __name__ == "__main__":
    mods = ["video", "audio", "text"]

    # Test 1: module-sized small case (single row block per modality).
    B, D = 8, 32
    k_v, k_a, k_t = jax.random.split(jax.random.PRNGKey(0), 3)
    outputs = {
        "video": jax.random.normal(k_v, (B, D), dtype=jnp.float32),
        "audio": jax.random.normal(k_a, (B, D), dtype=jnp.float32),
        "text":  jax.random.normal(k_t, (B, D), dtype=jnp.float32),
    }
    loss_fn = InfoNCEAnchorPallas(temperature=0.07, modalities=mods,
                                  anchor="video", gamma=0.0, cos=False)
    loss = jax.block_until_ready(loss_fn(outputs, current_epoch=0))
    ref = _reference_loss(outputs, "video", mods, 0.07)
    assert jnp.allclose(loss, ref, rtol=1e-5, atol=1e-5), (loss, ref)

    # Test 2: exercises the multi-row-block grid + online column logsumexp + batch padding.
    B2, D2 = 20, 40
    k1, k2, k3 = jax.random.split(jax.random.PRNGKey(1), 3)
    outputs2 = {
        "video": jax.random.normal(k1, (B2, D2), dtype=jnp.float32),
        "audio": jax.random.normal(k2, (B2, D2), dtype=jnp.float32),
        "text":  jax.random.normal(k3, (B2, D2), dtype=jnp.float32),
    }
    loss_fn2 = InfoNCEAnchorPallas(temperature=0.07, modalities=mods,
                                   anchor="video", block_rows=8)
    loss2 = jax.block_until_ready(loss_fn2(outputs2, current_epoch=0))
    ref2 = _reference_loss(outputs2, "video", mods, 0.07)
    assert jnp.allclose(loss2, ref2, rtol=3e-5, atol=3e-5), (loss2, ref2)

    print("KERNEL_OK")
</pallas_src>

<mosaic_0001>
module attributes {stable_mosaic.version = 11 : i64} {
  func.func @_infonce_kernel(%arg0: i32, %arg1: i32, %arg2: memref<1xf32, #tpu.memory_space<smem>>, %arg3: memref<8x128xf32, #tpu.memory_space<vmem>>, %arg4: memref<1x8x128xf32, #tpu.memory_space<vmem>>, %arg5: memref<1x1x1xf32, #tpu.memory_space<vmem>>, %arg6: memref<8x128xf32, #tpu.memory_space<vmem>>, %arg7: memref<1x8xf32, #tpu.memory_space<vmem>>, %arg8: memref<1x8xf32, #tpu.memory_space<vmem>>) attributes {dimension_semantics = [#tpu.dimension_semantics<parallel>, #tpu.dimension_semantics<arbitrary>], iteration_bounds = array<i64: 2, 1>, scalar_prefetch = 0 : i64, scratch_operands = 3 : i64, tpu.core_type = #tpu.core_type<tc>, window_params = [{transform_indices = @transform_0, window_bounds = array<i64: 1>}, {transform_indices = @transform_1, window_bounds = array<i64: 8, 128>}, {transform_indices = @transform_2, window_bounds = array<i64: 1, 8, 128>}, {transform_indices = @transform_3, window_bounds = array<i64: 1, 1, 1>}]} {
    %c0 = arith.constant 0 : index
    %0 = memref.load %arg2[%c0] : memref<1xf32, #tpu.memory_space<smem>>
    %cst = arith.constant 1.000000e+00 : f32
    %1 = arith.divf %cst, %0 : f32
    %c0_i32 = arith.constant 0 : i32
    %2 = arith.cmpi eq, %arg1, %c0_i32 : i32
    %3 = arith.extui %2 : i1 to i32
    %cst_0 = arith.constant -1.000000e+30 : f32
    %c0_i32_1 = arith.constant 0 : i32
    %4 = arith.cmpi ne, %3, %c0_i32_1 : i32
    scf.if %4 {
      %c0_33 = arith.constant 0 : index
      %c0_34 = arith.constant 0 : index
      %c0_35 = arith.constant 0 : index
      %67 = vector.load %arg4[%c0_33, %c0_34, %c0_35] : memref<1x8x128xf32, #tpu.memory_space<vmem>>, vector<1x8x128xf32>
      %68 = vector.shape_cast %67 : vector<1x8x128xf32> to vector<8x128xf32>
      %69 = arith.mulf %68, %68 : vector<8x128xf32>
      %cst_36 = arith.constant dense<0.000000e+00> : vector<8xf32>
      %70 = vector.multi_reduction <add>, %69, %cst_36 [1] : vector<8x128xf32> to vector<8xf32>
      %71 = vector.shape_cast %70 : vector<8xf32> to vector<8x1xf32>
      %cst_37 = arith.constant 1.000000e-24 : f32
      %72 = vector.broadcast %cst_37 : f32 to vector<8x1xf32>
      %73 = arith.maximumf %71, %72 : vector<8x1xf32>
      %74 = math.rsqrt %73 : vector<8x1xf32>
      %75 = vector.broadcast %74 : vector<8x1xf32> to vector<8x128xf32>
      %76 = arith.mulf %68, %75 : vector<8x128xf32>
      %c0_38 = arith.constant 0 : index
      %c0_39 = arith.constant 0 : index
      %77 = vector.load %arg6[%c0_38, %c0_39] : memref<8x128xf32, #tpu.memory_space<vmem>>, vector<8x128xf32>
      tpu.vector_store %arg6[%c0_38, %c0_39], %76 {strides = array<i32>} : memref<8x128xf32, #tpu.memory_space<vmem>>, vector<8x128xf32>,
      %78 = vector.broadcast %cst_0 : f32 to vector<1x8xf32>
      %c0_40 = arith.constant 0 : index
      %c0_41 = arith.constant 0 : index
      %79 = vector.load %arg7[%c0_40, %c0_41] : memref<1x8xf32, #tpu.memory_space<vmem>>, vector<1x8xf32>
      tpu.vector_store %arg7[%c0_40, %c0_41], %78 {strides = array<i32>} : memref<1x8xf32, #tpu.memory_space<vmem>>, vector<1x8xf32>,
      %cst_42 = arith.constant 0.000000e+00 : f32
      %80 = vector.broadcast %cst_42 : f32 to vector<1x8xf32>
      %c0_43 = arith.constant 0 : index
      %c0_44 = arith.constant 0 : index
      %81 = vector.load %arg8[%c0_43, %c0_44] : memref<1x8xf32, #tpu.memory_space<vmem>>, vector<1x8xf32>
      tpu.vector_store %arg8[%c0_43, %c0_44], %80 {strides = array<i32>} : memref<1x8xf32, #tpu.memory_space<vmem>>, vector<1x8xf32>,
      %cst_45 = arith.constant 0.000000e+00 : f32
      %82 = vector.broadcast %cst_45 : f32 to vector<1x1x1xf32>
      %c0_46 = arith.constant 0 : index
      %c0_47 = arith.constant 0 : index
      %c0_48 = arith.constant 0 : index
      %83 = vector.load %arg5[%c0_46, %c0_47, %c0_48] : memref<1x1x1xf32, #tpu.memory_space<vmem>>, vector<1x1x1xf32>
      tpu.vector_store %arg5[%c0_46, %c0_47, %c0_48], %82 {strides = array<i32>} : memref<1x1x1xf32, #tpu.memory_space<vmem>>, vector<1x1x1xf32>,
    } else {
    }
    %c0_2 = arith.constant 0 : index
    %c0_3 = arith.constant 0 : index
    %5 = vector.load %arg3[%c0_2, %c0_3] : memref<8x128xf32, #tpu.memory_space<vmem>>, vector<8x128xf32>
    %6 = arith.mulf %5, %5 : vector<8x128xf32>
    %cst_4 = arith.constant dense<0.000000e+00> : vector<8xf32>
    %7 = vector.multi_reduction <add>, %6, %cst_4 [1] : vector<8x128xf32> to vector<8xf32>
    %8 = vector.shape_cast %7 : vector<8xf32> to vector<8x1xf32>
    %cst_5 = arith.constant 1.000000e-24 : f32
    %9 = vector.broadcast %cst_5 : f32 to vector<8x1xf32>
    %10 = arith.maximumf %8, %9 : vector<8x1xf32>
    %11 = math.rsqrt %10 : vector<8x1xf32>
    %12 = vector.broadcast %1 : f32 to vector<8x1xf32>
    %13 = arith.mulf %11, %12 : vector<8x1xf32>
    %14 = vector.broadcast %13 : vector<8x1xf32> to vector<8x128xf32>
    %15 = arith.mulf %5, %14 : vector<8x128xf32>
    %c0_6 = arith.constant 0 : index
    %c0_7 = arith.constant 0 : index
    %16 = vector.load %arg6[%c0_6, %c0_7] : memref<8x128xf32, #tpu.memory_space<vmem>>, vector<8x128xf32>
    %cst_8 = arith.constant dense<0.000000e+00> : vector<8x8xf32>
    %17 = tpu.matmul %15, %16, %cst_8 {dimension_numbers = #tpu.dot_dimension_numbers<[1], [1], [0], [0], [0, 0, 1, 0], [], []>} : vector<8x128xf32>, vector<8x128xf32>, vector<8x8xf32> -> vector<8x8xf32>
    %c8_i32 = arith.constant 8 : i32
    %18 = arith.muli %arg1, %c8_i32 : i32
    %19 = tpu.iota {dimensions = array<i32: 0>} : vector<8x8xi32>
    %20 = vector.broadcast %18 : i32 to vector<8x8xi32>
    %21 = arith.addi %20, %19 : vector<8x8xi32>
    %22 = tpu.iota {dimensions = array<i32: 1>} : vector<8x8xi32>
    %cst_9 = arith.constant dense<0xFF800000> : vector<8xf32>
    %23 = vector.multi_reduction <maximumf>, %17, %cst_9 [1] : vector<8x8xf32> to vector<8xf32>
    %24 = vector.shape_cast %23 : vector<8xf32> to vector<8x1xf32>
    %25 = vector.broadcast %24 : vector<8x1xf32> to vector<8x8xf32>
    %26 = arith.subf %17, %25 : vector<8x8xf32>
    %27 = math.exp %26 : vector<8x8xf32>
    %cst_10 = arith.constant dense<0.000000e+00> : vector<8xf32>
    %28 = vector.multi_reduction <add>, %27, %cst_10 [1] : vector<8x8xf32> to vector<8xf32>
    %29 = vector.shape_cast %28 : vector<8xf32> to vector<8x1xf32>
    %30 = math.log %29 : vector<8x1xf32>
    %31 = arith.addf %24, %30 : vector<8x1xf32>
    %32 = arith.cmpi eq, %22, %21 : vector<8x8xi32>
    %cst_11 = arith.constant 0.000000e+00 : f32
    %33 = vector.broadcast %cst_11 : f32 to vector<8x8xf32>
    %34 = arith.select %32, %17, %33 : vector<8x8xi1>, vector<8x8xf32>
    %cst_12 = arith.constant dense<0.000000e+00> : vector<8xf32>
    %35 = vector.multi_reduction <add>, %34, %cst_12 [1] : vector<8x8xf32> to vector<8xf32>
    %36 = vector.shape_cast %35 : vector<8xf32> to vector<8x1xf32>
    %cst_13 = arith.constant 2.000000e+00 : f32
    %37 = vector.broadcast %cst_13 : f32 to vector<8x1xf32>
    %38 = arith.mulf %37, %36 : vector<8x1xf32>
    %39 = arith.subf %31, %38 : vector<8x1xf32>
    %c0_14 = arith.constant 0 : index
    %c0_15 = arith.constant 0 : index
    %c0_16 = arith.constant 0 : index
    %40 = vector.load %arg5[%c0_14, %c0_15, %c0_16] : memref<1x1x1xf32, #tpu.memory_space<vmem>>, vector<1x1x1xf32>
    %41 = vector.shape_cast %39 : vector<8x1xf32> to vector<1x8x1xf32>
    %cst_17 = arith.constant dense<0.000000e+00> : vector<1xf32>
    %42 = vector.multi_reduction <add>, %41, %cst_17 [1, 2] : vector<1x8x1xf32> to vector<1xf32>
    %43 = vector.shape_cast %42 : vector<1xf32> to vector<1x1x1xf32>
    %44 = vector.extract %43[0, 0, 0] : f32 from vector<1x1x1xf32>
    %45 = vector.broadcast %44 : f32 to vector<1x1x1xf32>
    %46 = arith.addf %40, %45 : vector<1x1x1xf32>
    %c0_18 = arith.constant 0 : index
    %c0_19 = arith.constant 0 : index
    %c0_20 = arith.constant 0 : index
    %47 = vector.load %arg5[%c0_18, %c0_19, %c0_20] : memref<1x1x1xf32, #tpu.memory_space<vmem>>, vector<1x1x1xf32>
    tpu.vector_store %arg5[%c0_18, %c0_19, %c0_20], %46 {strides = array<i32>} : memref<1x1x1xf32, #tpu.memory_space<vmem>>, vector<1x1x1xf32>,
    %cst_21 = arith.constant dense<0xFF800000> : vector<8xf32>
    %48 = vector.multi_reduction <maximumf>, %17, %cst_21 [0] : vector<8x8xf32> to vector<8xf32>
    %49 = vector.shape_cast %48 : vector<8xf32> to vector<1x8xf32>
    %c0_22 = arith.constant 0 : index
    %c0_23 = arith.constant 0 : index
    %50 = vector.load %arg7[%c0_22, %c0_23] : memref<1x8xf32, #tpu.memory_space<vmem>>, vector<1x8xf32>
    %51 = arith.maximumf %50, %49 : vector<1x8xf32>
    %52 = vector.broadcast %51 : vector<1x8xf32> to vector<8x8xf32>
    %53 = arith.subf %17, %52 : vector<8x8xf32>
    %54 = math.exp %53 : vector<8x8xf32>
    %c0_24 = arith.constant 0 : index
    %c0_25 = arith.constant 0 : index
    %55 = vector.load %arg8[%c0_24, %c0_25] : memref<1x8xf32, #tpu.memory_space<vmem>>, vector<1x8xf32>
    %56 = arith.subf %50, %51 : vector<1x8xf32>
    %57 = math.exp %56 : vector<1x8xf32>
    %58 = arith.mulf %55, %57 : vector<1x8xf32>
    %cst_26 = arith.constant dense<0.000000e+00> : vector<8xf32>
    %59 = vector.multi_reduction <add>, %54, %cst_26 [0] : vector<8x8xf32> to vector<8xf32>
    %60 = vector.shape_cast %59 : vector<8xf32> to vector<1x8xf32>
    %61 = arith.addf %58, %60 : vector<1x8xf32>
    %c0_27 = arith.constant 0 : index
    %c0_28 = arith.constant 0 : index
    %62 = vector.load %arg8[%c0_27, %c0_28] : memref<1x8xf32, #tpu.memory_space<vmem>>, vector<1x8xf32>
    tpu.vector_store %arg8[%c0_27, %c0_28], %61 {strides = array<i32>} : memref<1x8xf32, #tpu.memory_space<vmem>>, vector<1x8xf32>,
    %c0_29 = arith.constant 0 : index
    %c0_30 = arith.constant 0 : index
    %63 = vector.load %arg7[%c0_29, %c0_30] : memref<1x8xf32, #tpu.memory_space<vmem>>, vector<1x8xf32>
    tpu.vector_store %arg7[%c0_29, %c0_30], %51 {strides = array<i32>} : memref<1x8xf32, #tpu.memory_space<vmem>>, vector<1x8xf32>,
    %c0_i32_31 = arith.constant 0 : i32
    %64 = arith.cmpi eq, %arg1, %c0_i32_31 : i32
    %65 = arith.extui %64 : i1 to i32
    %c0_i32_32 = arith.constant 0 : i32
    %66 = arith.cmpi ne, %65, %c0_i32_32 : i32
    scf.if %66 {
      %c0_33 = arith.constant 0 : index
      %c0_34 = arith.constant 0 : index
      %67 = vector.load %arg7[%c0_33, %c0_34] : memref<1x8xf32, #tpu.memory_space<vmem>>, vector<1x8xf32>
      %c0_35 = arith.constant 0 : index
      %c0_36 = arith.constant 0 : index
      %68 = vector.load %arg8[%c0_35, %c0_36] : memref<1x8xf32, #tpu.memory_space<vmem>>, vector<1x8xf32>
      %69 = math.log %68 : vector<1x8xf32>
      %70 = arith.addf %67, %69 : vector<1x8xf32>
      %c0_37 = arith.constant 0 : index
      %c0_38 = arith.constant 0 : index
      %c0_39 = arith.constant 0 : index
      %71 = vector.load %arg5[%c0_37, %c0_38, %c0_39] : memref<1x1x1xf32, #tpu.memory_space<vmem>>, vector<1x1x1xf32>
      %72 = vector.shape_cast %70 : vector<1x8xf32> to vector<1x1x8xf32>
      %cst_40 = arith.constant dense<0.000000e+00> : vector<1xf32>
      %73 = vector.multi_reduction <add>, %72, %cst_40 [1, 2] : vector<1x1x8xf32> to vector<1xf32>
      %74 = vector.shape_cast %73 : vector<1xf32> to vector<1x1x1xf32>
      %75 = vector.extract %74[0, 0, 0] : f32 from vector<1x1x1xf32>
      %76 = vector.broadcast %75 : f32 to vector<1x1x1xf32>
      %77 = arith.addf %71, %76 : vector<1x1x1xf32>
      %cst_41 = arith.constant 6.250000e-02 : f32
      %78 = vector.broadcast %cst_41 : f32 to vector<1x1x1xf32>
      %79 = arith.mulf %77, %78 : vector<1x1x1xf32>
      %c0_42 = arith.constant 0 : index
      %c0_43 = arith.constant 0 : index
      %c0_44 = arith.constant 0 : index
      %80 = vector.load %arg5[%c0_42, %c0_43, %c0_44] : memref<1x1x1xf32, #tpu.memory_space<vmem>>, vector<1x1x1xf32>
      tpu.vector_store %arg5[%c0_42, %c0_43, %c0_44], %79 {strides = array<i32>} : memref<1x1x1xf32, #tpu.memory_space<vmem>>, vector<1x1x1xf32>,
    } else {
    }
    return
  }
  func.func @transform_0(%arg0: i32, %arg1: i32) -> i32 {
    %c0_i32 = arith.constant 0 : i32
    %c0_i32_0 = arith.constant 0 : i32
    return %c0_i32 : i32
  }
  func.func @transform_1(%arg0: i32, %arg1: i32) -> (i32, i32) {
    %c0_i32 = arith.constant 0 : i32
    %c0_i32_0 = arith.constant 0 : i32
    return %arg1, %c0_i32 : i32, i32
  }
  func.func @transform_2(%arg0: i32, %arg1: i32) -> (i32, i32, i32) {
    %c0_i32 = arith.constant 0 : i32
    %c0_i32_0 = arith.constant 0 : i32
    %c0_i32_1 = arith.constant 0 : i32
    return %arg0, %c0_i32, %c0_i32_0 : i32, i32, i32
  }
  func.func @transform_3(%arg0: i32, %arg1: i32) -> (i32, i32, i32) {
    %c0_i32 = arith.constant 0 : i32
    %c0_i32_0 = arith.constant 0 : i32
    %c0_i32_1 = arith.constant 0 : i32
    return %arg0, %c0_i32, %c0_i32_0 : i32, i32, i32
  }
}

</mosaic_0001>

<llo_original>
// kernel: infonce_anchor_pairs_loss.1
$region0: #{infonce_anchor_pairs_loss.1}
  #allocation0 [shape = 'u32[]', space=smem, size = 0x4, offset = 0x4, fixed_abs, tag = 'smem constant byte address 0x4 - core index']
  #allocation1 [shape = 'u32[144,128]{1,0:T(1,128)}', space=vmem, size = 0x12000, scoped, tag = 'internal scratch']
  #allocation2 [shape = 'f32[8,128]{1,0:T(8,128)}', space=vmem, size = 0x1000, scoped, tag = 'scratch operand']
  #allocation3 [shape = 'f32[1,8]{1,0:T(1,128)}', space=vmem, size = 0x200, scoped, tag = 'scratch operand']
  #allocation4 [shape = 'f32[1,8]{1,0:T(1,128)}', space=vmem, size = 0x200, scoped, tag = 'scratch operand']
  #allocation5 [shape = 'f32[1]{0:T(128)S(6)}', space=smem, size = 0x200, scoped, tag = 'scoped memory for infonce_anchor_pairs_loss.1']
  %s0 = inlined_call_operand.<no memory space> [shape: f32[1], index: 0, kind: input, shape index: {}]
  %s1 = inlined_call_operand.vmem [shape: f32[8,128], index: 1, kind: input, shape index: {}]
  %s2 = inlined_call_operand.vmem [shape: f32[2,8,128], index: 2, kind: input, shape index: {}]
  %s3 = inlined_call_operand.vmem [shape: f32[2,1,1], index: 3, kind: output, shape index: {}]
  %s4 = sld [smem:[#allocation0]]
  $region53: #{infonce_anchor_pairs_loss.1} parent=0
    _
  %s6 = ssub.s32 1, %s4
  %s7 = scalar_select 0, %s6, %s4
  %8 = sst [smem:[#allocation5]] %s0
  loop: start=0, step=1, limit=4
  $region2: #{infonce_anchor_pairs_loss.1} parent=0 // loop_pre_header
    _
  $region3: #{infonce_anchor_pairs_loss.1} parent=0 // loop_header
    %s10 = sphi 0, %s14
    %p11 = scmp.ge.s32.totalorder %s10, 4
    %s17 = sphi 0, %s29
    %s18 = sphi 0, %s25
    %s19 = sphi 0, %s17
    %s20 = sphi 0, %s18
    %s21 = sphi 0, %s19
    %s22 = sphi 0, %s20
    %s30 = sphi 0, %s30
    %s32 = sphi 0, %s30
    %s33 = sphi 0, %s32
    %s47 = sphi 0, %s33
    %s53 = sphi 0, %s55
    %s56 = sphi 0, %s53
    %s57 = sphi 0, %s56
    %s73 = sphi 0, %s57
    %s79 = sphi 0, %s81
    %s82 = sphi 0, %s79
    %s83 = sphi 0, %s82
    %s99 = sphi 0, %s83
    %s105 = sphi 0, %s107
    %s108 = sphi 0, %s105
    %s109 = sphi 0, %s108
    %s125 = sphi 0, %s109
  $region4: #{infonce_anchor_pairs_loss.1} parent=0 // loop_header_branch
    %13 = sbr.rel (%p11) target = $region8
  $region5: #{infonce_anchor_pairs_loss.1} parent=0 // loop_body
    %s15 = ssub.s32 %s10, 1
    %s16 = ssub.s32 %s10, 2
    %s23 = sadd.s32 1, %s18
    %p24 = scmp.ge.s32.totalorder %s23, 1
    %s25 = scalar_select %p24, 0, %s23
    %s26 = sadd.s32 1, %s17
    %s27 = scalar_select %p24, %s26, %s17
    %p28 = scmp.ge.s32.totalorder %s27, 2
    %s29 = scalar_select %p28, 0, %s27
    %s31 = sadd.s32 %s30, 1
    %p34 = scmp.eq.s32.totalorder %s10, 1
    %p35 = scmp.ne.s32.totalorder %s30, %s32
    %p36 = scmp.eq.s32.totalorder %s10, 0
    %p37 = por %p35, %p36
    %p38 = scmp.ne.s32.totalorder %s30, %s32
    %p39 = scmp.eq.s32.totalorder %s15, 1
    %p40 = por %p38, %p39
    %p41 = scmp.ne.s32.totalorder %s32, %s33
    %p42 = scmp.eq.s32.totalorder %s15, 0
    %p43 = por %p41, %p42
    %p44 = scmp.ne.s32.totalorder %s32, %s33
    %p45 = scmp.eq.s32.totalorder %s16, 1
    %p46 = por %p44, %p45
    %p48 = scmp.ne.s32.totalorder %s33, %s47
    %p49 = scmp.eq.s32.totalorder %s16, 0
    %p50 = por %p48, %p49
    %s51 = ssub.s32 %s18, %s25
    %p52 = scmp.eq.s32.totalorder %s51, 0
    %s54 = sadd.s32 %s53, 1
    %s55 = scalar_select %p52, %s53, %s54
    %p58 = pneg %p52
    %p59 = scmp.eq.s32.totalorder %s10, 1
    %p60 = por %p58, %p59
    %p61 = scmp.ne.s32.totalorder %s53, %s56
    %p62 = scmp.eq.s32.totalorder %s10, 0
    %p63 = por %p61, %p62
    %p64 = scmp.ne.s32.totalorder %s53, %s56
    %p65 = scmp.eq.s32.totalorder %s15, 1
    %p66 = por %p64, %p65
    %p67 = scmp.ne.s32.totalorder %s56, %s57
    %p68 = scmp.eq.s32.totalorder %s15, 0
    %p69 = por %p67, %p68
    %p70 = scmp.ne.s32.totalorder %s56, %s57
    %p71 = scmp.eq.s32.totalorder %s16, 1
    %p72 = por %p70, %p71
    %p74 = scmp.ne.s32.totalorder %s57, %s73
    %p75 = scmp.eq.s32.totalorder %s16, 0
    %p76 = por %p74, %p75
    %s77 = ssub.s32 %s17, %s29
    %p78 = scmp.eq.s32.totalorder %s77, 0
    %s80 = sadd.s32 %s79, 1
    %s81 = scalar_select %p78, %s79, %s80
    %p84 = pneg %p78
    %p85 = scmp.eq.s32.totalorder %s10, 1
    %p86 = por %p84, %p85
    %p87 = scmp.ne.s32.totalorder %s79, %s82
    %p88 = scmp.eq.s32.totalorder %s10, 0
    %p89 = por %p87, %p88
    %p90 = scmp.ne.s32.totalorder %s79, %s82
    %p91 = scmp.eq.s32.totalorder %s15, 1
    %p92 = por %p90, %p91
    %p93 = scmp.ne.s32.totalorder %s82, %s83
    %p94 = scmp.eq.s32.totalorder %s15, 0
    %p95 = por %p93, %p94
    %p96 = scmp.ne.s32.totalorder %s82, %s83
    %p97 = scmp.eq.s32.totalorder %s16, 1
    %p98 = por %p96, %p97
    %p100 = scmp.ne.s32.totalorder %s83, %s99
    %p101 = scmp.eq.s32.totalorder %s16, 0
    %p102 = por %p100, %p101
    %s103 = ssub.s32 %s17, %s29
    %p104 = scmp.eq.s32.totalorder %s103, 0
    %s106 = sadd.s32 %s105, 1
    %s107 = scalar_select %p104, %s105, %s106
    %p110 = pneg %p104
    %p111 = scmp.eq.s32.totalorder %s10, 1
    %p112 = por %p110, %p111
    %p113 = scmp.ne.s32.totalorder %s105, %s108
    %p114 = scmp.eq.s32.totalorder %s10, 0
    %p115 = por %p113, %p114
    %p116 = scmp.ne.s32.totalorder %s105, %s108
    %p117 = scmp.eq.s32.totalorder %s15, 1
    %p118 = por %p116, %p117
    %p119 = scmp.ne.s32.totalorder %s108, %s109
    %p120 = scmp.eq.s32.totalorder %s15, 0
    %p121 = por %p119, %p120
    %p122 = scmp.ne.s32.totalorder %s108, %s109
    %p123 = scmp.eq.s32.totalorder %s16, 1
    %p124 = por %p122, %p123
    %p126 = scmp.ne.s32.totalorder %s109, %s125
    %p127 = scmp.eq.s32.totalorder %s16, 0
    %p128 = por %p126, %p127
    %p129 = scmp.le.s32.totalorder 1, %s10
    %p130 = scmp.lt.s32.totalorder %s10, 3
    %p131 = pnand %p129, %p130
    %p132 = pneg %p131
    // Predicated region
    $region9: #{infonce_anchor_pairs_loss.1} parent=5 // pred_check
      _
    $region10: #{infonce_anchor_pairs_loss.1} parent=5 // pred_check_branch
      %134 = sbr.rel (%p131) target = $region12
    $region11: #{infonce_anchor_pairs_loss.1} parent=5 // pred_region
      %s135 = ssub.s32 %s10, 1
      // Predicated region
      $region13: #{infonce_anchor_pairs_loss.1} parent=11 // pred_check
        %p136 = pneg %p43
      $region14: #{infonce_anchor_pairs_loss.1} parent=11 // pred_check_branch
        %138 = sbr.rel (%p136) target = $region16
      $region15: #{infonce_anchor_pairs_loss.1} parent=11 // pred_region
        _
      $region16: #{infonce_anchor_pairs_loss.1} parent=11 // pred_fallthru
        _
      // Predicated region
      $region17: #{infonce_anchor_pairs_loss.1} parent=11 // pred_check
        %p139 = pneg %p69
      $region18: #{infonce_anchor_pairs_loss.1} parent=11 // pred_check_branch
        %141 = sbr.rel (%p139) target = $region20
      $region19: #{infonce_anchor_pairs_loss.1} parent=11 // pred_region
        %p142 = scmp.lt.s32.totalorder %s20, 0
        %s143 = scalar_select %p142, %s20, 0
        %s144 = smul.addr %s143, 8
        %s145 = scalar_lea.vmem %s1, %s144
      $region20: #{infonce_anchor_pairs_loss.1} parent=11 // pred_fallthru
        _
    $region12: #{infonce_anchor_pairs_loss.1} parent=5 // pred_fallthru
      _
    %p146 = scmp.lt.s32.totalorder %s10, 2
    // Predicated region
    $region21: #{infonce_anchor_pairs_loss.1} parent=5 // pred_check
      %p147 = pneg %p146
    $region22: #{infonce_anchor_pairs_loss.1} parent=5 // pred_check_branch
      %149 = sbr.rel (%p147) target = $region24
    $region23: #{infonce_anchor_pairs_loss.1} parent=5 // pred_region
      // Predicated region
      $region25: #{infonce_anchor_pairs_loss.1} parent=23 // pred_check
        %p150 = pneg %p89
      $region26: #{infonce_anchor_pairs_loss.1} parent=23 // pred_check_branch
        %152 = sbr.rel (%p150) target = $region28
      $region27: #{infonce_anchor_pairs_loss.1} parent=23 // pred_region
        %p153 = scmp.lt.s32.totalorder %s17, 1
        %s154 = scalar_select %p153, %s17, 1
        %s155 = smul.addr %s154, 8
        %s156 = scalar_lea.vmem %s2, %s155
      $region28: #{infonce_anchor_pairs_loss.1} parent=23 // pred_fallthru
        _
    $region24: #{infonce_anchor_pairs_loss.1} parent=5 // pred_fallthru
      _
    %p157 = scmp.le.s32.totalorder 1, %s10
    %p158 = scmp.lt.s32.totalorder %s10, 3
    %p159 = pnand %p157, %p158
    %p160 = pneg %p159
    // Predicated region
    $region29: #{infonce_anchor_pairs_loss.1} parent=5 // pred_check
      _
    $region30: #{infonce_anchor_pairs_loss.1} parent=5 // pred_check_branch
      %162 = sbr.rel (%p159) target = $region32
    $region31: #{infonce_anchor_pairs_loss.1} parent=5 // pred_region
      %s163 = ssub.s32 %s10, 1
      %p164 = pneg %p43
      %p165 = pneg %p40
      %p166 = scmp.lt.s32.totalorder %s20, 0
      %s167 = scalar_select %p166, %s20, 0
      %s168 = smul.addr %s167, 8
      %s169 = scalar_lea.vmem %s1, %s168
      %p170 = pneg %p69
      %p171 = pneg %p66
      %p172 = scmp.lt.s32.totalorder %s19, 1
      %s173 = scalar_select %p172, %s19, 1
      %s174 = smul.addr %s173, 8
      %s175 = scalar_lea.vmem %s2, %s174
      %p176 = pneg %p95
      %p177 = pneg %p92
      %p178 = pneg %p121
      %p179 = pneg %p118
      %p180 = scmp.lt.s32.totalorder %s19, 1
      %s181 = scalar_select %p180, %s19, 1
      %s182 = scalar_lea.vmem %s3, %s181
      %p183 = scmp.lt.s32.totalorder %s20, 0
      %s184 = scalar_select %p183, %s20, 0
      %s185 = smul.addr %s184, 8
      %s186 = scalar_lea.vmem %s1, %s185
      %p187 = scmp.lt.s32.totalorder %s19, 1
      %s188 = scalar_select %p187, %s19, 1
      %s189 = smul.addr %s188, 8
      %s190 = scalar_lea.vmem %s2, %s189
      %p191 = scmp.lt.s32.totalorder %s19, 1
      %s192 = scalar_select %p191, %s19, 1
      %s193 = scalar_lea.vmem %s3, %s192
      %s194 = sld [smem:[#allocation5]]
      %v195 = vstv %s194
      %v196 = vrcp.pop %v195
      %s197 = vtos %v196
      %p198 = scmp.eq.s32.totalorder %s20, 0
      // Predicated region
      $region33: #{infonce_anchor_pairs_loss.1} parent=31 // pred_check
        %p199 = pneg %p198
      $region34: #{infonce_anchor_pairs_loss.1} parent=31 // pred_check_branch
        %201 = sbr.rel (%p199) target = $region36
      $region35: #{infonce_anchor_pairs_loss.1} parent=31 // pred_region
        %v202 = vld [vmem:[%s190] sm:$0xff]
        %v203 = vmul.f32 %v202, %v202
        %204 = vadd.xlane.f32.xlu0 %v203
        %v205 = vpop.xlane.xlu0 %204
        %v206 = vmax.f32 %v205, 1e-24
        %v207 = vrsqrt.pop %v206
        %v208 = vmul.f32 %v202, %v207
        %209 = vst [vmem:[#allocation2] sm:$0xff] %v208
        %vm210 = vcmask 57344
        %211 = vst.msk [vmem:[#allocation3] sm:$0x1] %vm210, -1e+30
        %212 = vst.msk [vmem:[#allocation4] sm:$0x1] %vm210, 0.0
        %vm213 = vcmask 0
        %214 = vst.msk [vmem:[%s193] sm:$0x1] %vm213, 0.0
      $region36: #{infonce_anchor_pairs_loss.1} parent=31 // pred_fallthru
        _
      %v215 = vld [vmem:[%s186] sm:$0xff]
      %v216 = vmul.f32 %v215, %v215
      %217 = vadd.xlane.f32.xlu0 %v216
      %v218 = vpop.xlane.xlu0 %217
      %v219 = vmax.f32 %v218, 1e-24
      %v220 = vrsqrt.pop %v219
      %v221 = vstv %s197
      %v222 = vmul.f32 %v220, %v221
      %v223 = vmul.f32 %v215, %v222
      %v224 = vld [vmem:[#allocation2] sm:$0xff]
      %225 = vmatprep.subr.mxu0 0.0
      %226 = vmatpush1.xpose.msra.mxu0 0.0
      %227 = vmatprep.subr.mxu0 0.0
      %228 = vmatpush1.xpose.msra.mxu0 0.0
      %229 = vmatprep.subr.mxu0 0.0
      %230 = vmatpush1.xpose.msra.mxu0 0.0
      %231 = vmatprep.subr.mxu0 0.0
      %232 = vmatpush1.xpose.msra.mxu0 0.0
      %233 = vmatprep.subr.mxu0 0.0
      %234 = vmatpush1.xpose.msra.mxu0 0.0
      %235 = vmatprep.subr.mxu0 0.0
      %236 = vmatpush1.xpose.msra.mxu0 0.0
      %237 = vmatprep.subr.mxu0 0.0
      %238 = vmatpush1.xpose.msra.mxu0 0.0
      %239 = vmatprep.subr.mxu0 0.0
      %240 = vmatpush1.xpose.msra.mxu0 0.0
      %241 = vmatprep.subr.mxu0 0.0
      %242 = vmatpush1.xpose.msra.mxu0 0.0
      %243 = vmatprep.subr.mxu0 0.0
      %244 = vmatpush1.xpose.msra.mxu0 0.0
      %245 = vmatprep.subr.mxu0 0.0
      %246 = vmatpush1.xpose.msra.mxu0 0.0
      %247 = vmatprep.subr.mxu0 0.0
      %248 = vmatpush1.xpose.msra.mxu0 0.0
      %249 = vmatprep.subr.mxu0 0.0
      %250 = vmatpush1.xpose.msra.mxu0 0.0
      %251 = vmatprep.subr.mxu0 0.0
      %252 = vmatpush1.xpose.msra.mxu0 0.0
      %253 = vmatprep.subr.mxu0 0.0
      %254 = vmatpush1.xpose.msra.mxu0 0.0
      %255 = vmatprep.subr.mxu0 0.0
      %256 = vmatpush1.xpose.msra.mxu0 %v224
      %257 = vmatprep.subr.mxu0 0.0
      %258 = vmatpush2.xpose.msra.mxu0 0.0
      %259 = vmatprep.subr.mxu0 0.0
      %260 = vmatpush2.xpose.msra.mxu0 0.0
      %261 = vmatprep.subr.mxu0 0.0
      %262 = vmatpush2.xpose.msra.mxu0 0.0
      %263 = vmatprep.subr.mxu0 0.0
      %264 = vmatpush2.xpose.msra.mxu0 0.0
      %265 = vmatprep.subr.mxu0 0.0
      %266 = vmatpush2.xpose.msra.mxu0 0.0
      %267 = vmatprep.subr.mxu0 0.0
      %268 = vmatpush2.xpose.msra.mxu0 0.0
      %269 = vmatprep.subr.mxu0 0.0
      %270 = vmatpush2.xpose.msra.mxu0 0.0
      %271 = vmatprep.subr.mxu0 0.0
      %272 = vmatpush2.xpose.msra.mxu0 0.0
      %273 = vmatprep.subr.mxu0 0.0
      %274 = vmatpush2.xpose.msra.mxu0 0.0
      %275 = vmatprep.subr.mxu0 0.0
      %276 = vmatpush2.xpose.msra.mxu0 0.0
      %277 = vmatprep.subr.mxu0 0.0
      %278 = vmatpush2.xpose.msra.mxu0 0.0
      %279 = vmatprep.subr.mxu0 0.0
      %280 = vmatpush2.xpose.msra.mxu0 0.0
      %281 = vmatprep.subr.mxu0 0.0
      %282 = vmatpush2.xpose.msra.mxu0 0.0
      %283 = vmatprep.subr.mxu0 0.0
      %284 = vmatpush2.xpose.msra.mxu0 0.0
      %285 = vmatprep.subr.mxu0 0.0
      %286 = vmatpush2.xpose.msra.mxu0 0.0
      %287 = vmatprep.subr.mxu0 0.0
      %288 = vmatpush2.xpose.msra.mxu0 0.0
      %289 = vmatprep.mubr.f32.mxu0 0.0
      %290 = vmatmul.mubr.f32.gmra.mxu0 %v223
      %v291 = vpop.f32.mrf.mxu0
      %v292 = vadd.f32 0.0, %v291
      %v293 = vpop.f32.mrf.mxu0
      %294 = vdwg.mxu0
      %s295 = smul.u32 %s20, 8
      %v296 = vlaneseq
      %v297 = vshrl.u32 %v296, 7
      %v298 = vstv %s295
      %v299 = vadd.s32 %v298, %v297
      %v300 = vlaneseq
      %v301 = vand.u32 %v300, 127
      %vm302 = vcmask 64512
      %v303 = vsel %vm302, %v292, -inf
      %304 = vmax.xlane.f32.xlu0 %v303
      %v305 = vpop.xlane.xlu0 %304
      %v306 = vsub.f32 %v292, %v305
      %v307 = vmul.f32 %v306, 1.442695
      %v308 = vpow.pop %v307
      %v309 = vsel %vm302, %v308, 0.0
      %310 = vadd.xlane.f32.xlu0 %v309
      %v311 = vpop.xlane.xlu0 %310
      %v312 = vlog2.pop %v311
      %v313 = vmul.f32 %v312, 0.6931472
      %v314 = vadd.f32 %v305, %v313
      %vm315 = vcmp.eq.s32.totalorder %v301, %v299
      %v316 = vsel %vm315, %v292, 0.0
      %v317 = vsel %vm302, %v316, 0.0
      %318 = vadd.xlane.f32.xlu0 %v317
      %v319 = vpop.xlane.xlu0 %318
      %v320 = vmul.f32 %v319, 2.0
      %v321 = vsub.f32 %v314, %v320
      %v322 = vld [vmem:[%s193] sm:$0x1]
      %vm323 = vcmask 7168
      %v324 = vsel %vm323, %v321, 0.0
      %325 = vadd.xlane.f32.xlu0 %v324
      %v326 = vpop.xlane.xlu0 %325
      %v327 = vrot.slane %v326, 4
      %v328 = vadd.f32 %v326, %v327
      %v329 = vrot.slane %v328, 2
      %v330 = vadd.f32 %v328, %v329
      %v331 = vrot.slane %v330, 1
      %v332 = vadd.f32 %v330, %v331
      %s333 = vtos %v332
      %v334 = vstv %s333
      %v335 = vadd.f32 %v322, %v334
      %vm336 = vcmask 0
      %337 = vst.msk [vmem:[%s193] sm:$0x1] %vm336, %v335
      %v338 = vrot.slane %v303, 4
      %v339 = vmax.f32 %v303, %v338
      %v340 = vrot.slane %v339, 2
      %v341 = vmax.f32 %v339, %v340
      %v342 = vrot.slane %v341, 1
      %v343 = vmax.f32 %v341, %v342
      %v344 = vld [vmem:[#allocation3] sm:$0x1]
      %v345 = vmax.f32 %v344, %v343
      %v347 = vlaneseq
      %v348 = vshrl.u32 %v347, 7
      %v349 = vsub.s32 0, %v348
      %v350 = vrot.slane %v345, %v349
      %v352 = vsub.f32 %v292, %v350
      %v353 = vmul.f32 %v352, 1.442695
      %v354 = vpow.pop %v353
      %v355 = vld [vmem:[#allocation4] sm:$0x1]
      %v356 = vsub.f32 %v344, %v345
      %v357 = vmul.f32 %v356, 1.442695
      %v358 = vpow.pop %v357
      %v359 = vmul.f32 %v355, %v358
      %v360 = vsel %vm302, %v354, 0.0
      %v361 = vrot.slane %v360, 4
      %v362 = vadd.f32 %v360, %v361
      %v363 = vrot.slane %v362, 2
      %v364 = vadd.f32 %v362, %v363
      %v365 = vrot.slane %v364, 1
      %v366 = vadd.f32 %v364, %v365
      %v367 = vadd.f32 %v359, %v366
      %vm368 = vcmask 57344
      %369 = vst.msk [vmem:[#allocation4] sm:$0x1] %vm368, %v367
      %370 = vst.msk [vmem:[#allocation3] sm:$0x1] %vm368, %v345
      // Predicated region
      $region37: #{infonce_anchor_pairs_loss.1} parent=31 // pred_check
        %p371 = pneg %p198
      $region38: #{infonce_anchor_pairs_loss.1} parent=31 // pred_check_branch
        %373 = sbr.rel (%p371) target = $region40
      $region39: #{infonce_anchor_pairs_loss.1} parent=31 // pred_region
        %v374 = vld [vmem:[#allocation3] sm:$0x1]
        %v375 = vld [vmem:[#allocation4] sm:$0x1]
        %v376 = vlog2.pop %v375
        %v377 = vmul.f32 %v376, 0.6931472
        %v378 = vadd.f32 %v374, %v377
        %v379 = vld [vmem:[%s193] sm:$0x1]
        %v380 = vsel %vm368, %v378, 0.0
        %381 = vadd.xlane.f32.xlu0 %v380
        %v382 = vpop.xlane.xlu0 %381
        %v383 = vrot.slane %v382, 4
        %v384 = vadd.f32 %v382, %v383
        %v385 = vrot.slane %v384, 2
        %v386 = vadd.f32 %v384, %v385
        %v387 = vrot.slane %v386, 1
        %v388 = vadd.f32 %v386, %v387
        %s389 = vtos %v388
        %v390 = vstv %s389
        %v391 = vadd.f32 %v379, %v390
        %v392 = vmul.f32 %v391, 0.0625
        %393 = vst.msk [vmem:[%s193] sm:$0x1] %vm336, %v392
      $region40: #{infonce_anchor_pairs_loss.1} parent=31 // pred_fallthru
        _
      %p394 = scmp.lt.s32.totalorder %s19, 1
      %s395 = scalar_select %p394, %s19, 1
      %s396 = scalar_lea.vmem %s3, %s395
      // Predicated region
      $region41: #{infonce_anchor_pairs_loss.1} parent=31 // pred_check
        %p397 = pneg %p118
      $region42: #{infonce_anchor_pairs_loss.1} parent=31 // pred_check_branch
        %399 = sbr.rel (%p397) target = $region44
      $region43: #{infonce_anchor_pairs_loss.1} parent=31 // pred_region
        _
      $region44: #{infonce_anchor_pairs_loss.1} parent=31 // pred_fallthru
        _
    $region32: #{infonce_anchor_pairs_loss.1} parent=5 // pred_fallthru
      _
    %p400 = scmp.le.s32.totalorder 2, %s10
    // Predicated region
    $region45: #{infonce_anchor_pairs_loss.1} parent=5 // pred_check
      %p401 = pneg %p400
    $region46: #{infonce_anchor_pairs_loss.1} parent=5 // pred_check_branch
      %403 = sbr.rel (%p401) target = $region48
    $region47: #{infonce_anchor_pairs_loss.1} parent=5 // pred_region
      %s404 = ssub.s32 %s10, 2
      // Predicated region
      $region49: #{infonce_anchor_pairs_loss.1} parent=47 // pred_check
        %p405 = pneg %p124
      $region50: #{infonce_anchor_pairs_loss.1} parent=47 // pred_check_branch
        %407 = sbr.rel (%p405) target = $region52
      $region51: #{infonce_anchor_pairs_loss.1} parent=47 // pred_region
        %p408 = scmp.lt.s32.totalorder %s21, 1
        %s409 = scalar_select %p408, %s21, 1
        %s410 = scalar_lea.vmem %s3, %s409
      $region52: #{infonce_anchor_pairs_loss.1} parent=47 // pred_fallthru
        _
    $region48: #{infonce_anchor_pairs_loss.1} parent=5 // pred_fallthru
      _
  $region6: #{infonce_anchor_pairs_loss.1} parent=0 // loop_footer
    %s14 = sadd.s32 1, %s10
  $region7: #{infonce_anchor_pairs_loss.1} parent=0 // loop_footer_branch
    %9 = sbr.rel target = $region3
  $region8: #{infonce_anchor_pairs_loss.1} parent=0 // loop_exit
    _

</llo_original>
